<compile_context>
chip_gen: v7x
topology: tpu7x:2x2x1
jax: 0.10.0
libtpu: 0.0.40
codegen_flags: <defaults>
</compile_context>

<pallas_src>
import functools

import jax
import jax.numpy as jnp
from jax.experimental import pallas as pl
from jax.experimental.pallas import tpu as pltpu

_LANE = 128


# ---------------------------------------------------------------------------
# In-kernel helpers
# ---------------------------------------------------------------------------
def _split3_bf16(x):
    """Truncation-based 3x bf16 split of f32 x (x == c0+c1+c2 for normal finite x).

    Bit-masked truncation means no finite value ever rounds up to inf; +-inf is
    carried by c0 alone (residual guarded to 0) and NaN stays NaN.
    """
    mask = jnp.uint32(0xFFFF0000)
    finite = jnp.abs(x) < jnp.inf
    masked = pltpu.bitcast(pltpu.bitcast(x, jnp.uint32) & mask, jnp.float32)
    hi = jnp.where(finite, masked, x)                    # exact bf16 value
    c0 = hi.astype(jnp.bfloat16)
    r1 = jnp.where(finite, x - hi, jnp.float32(0.0))     # exact, <=16 sig bits
    m1 = pltpu.bitcast(pltpu.bitcast(r1, jnp.uint32) & mask, jnp.float32)
    c1 = m1.astype(jnp.bfloat16)                         # exact
    c2 = (r1 - m1).astype(jnp.bfloat16)                  # exact (<=8 sig bits)
    return c0, c1, c2


def _make_kernel(*, s, W, wb, nc, packed, is_f32):
    """Build the kernel body for the chosen layout (static config closed over)."""
    sW = s * W
    swb = s * wb

    def kernel(x_ref, m_ref, o_ref):
        m = m_ref[...]                                   # 0/1 replication matrix, bf16
        if packed:
            # One matmul, one full-width lane-dense store per step.
            x = x_ref[...]
            if is_f32:
                c0, c1, c2 = _split3_bf16(x)
                o_ref[...] = jnp.dot(c0, m, preferred_element_type=jnp.float32)
                o_ref[...] += jnp.dot(c1, m, preferred_element_type=jnp.float32)
                o_ref[...] += jnp.dot(c2, m, preferred_element_type=jnp.float32)
            else:
                o_ref[...] = jnp.dot(
                    x, m, preferred_element_type=jnp.float32).astype(o_ref.dtype)
        else:
            # Width-only replication per chunk; height replication via s stores.
            for c in range(nc):
                xc = x_ref[:, c * wb:(c + 1) * wb]
                if is_f32:
                    c0, c1, c2 = _split3_bf16(xc)
                    y = jnp.dot(c0, m, preferred_element_type=jnp.float32)
                    y = y + jnp.dot(c1, m, preferred_element_type=jnp.float32)
                    y = y + jnp.dot(c2, m, preferred_element_type=jnp.float32)
                else:
                    y = jnp.dot(xc, m, preferred_element_type=jnp.float32)
                y = y.astype(o_ref.dtype)
                for k in range(s):
                    off = k * sW + c * swb
                    o_ref[:, off:off + swb] = y

    return kernel


# ---------------------------------------------------------------------------
# Host-side sizing helpers
# ---------------------------------------------------------------------------
def _largest_divisor_leq(n, cap):
    best = 1
    for d in range(1, min(n, cap) + 1):
        if n % d == 0:
            best = d
    return best


def _pick_width_chunk(W, max_wb=256):
    """Contraction chunk for the wide-W path: largest divisor of W <= 256."""
    if W <= max_wb:
        return W
    for wb in range(max_wb, 63, -1):
        if W % wb == 0:
            return wb
    return W  # prime-ish width: single full-width matmul (rare, still correct)


def _vmem_limit_bytes():
    """Per-generation VMEM limit: 64 MiB on 128-MiB parts (v5e/v6e), 32 MiB on v7x."""
    cap = 64 * 1024 * 1024
    try:
        cap = int(pltpu.get_tpu_info().vmem_capacity_bytes)
    except Exception:
        pass
    return 64 * 1024 * 1024 if cap >= 96 * 1024 * 1024 else 32 * 1024 * 1024


def _pick_row_tile(n_rows, win, wout, itemsize, budget_bytes, is_f32):
    """Rows per grid step so that double-buffered in/out blocks + bf16 chunk
    temporaries + f32 partials fit the budget (multiple of 16 rows)."""
    per_row = 2 * (win + wout) * itemsize          # in + out, double buffered
    if is_f32:
        per_row += 3 * win * 2                     # bf16 chunk temporaries
    per_row += wout * 4                            # f32 matmul partials / acc
    tr = max(16, (budget_bytes // per_row) // 16 * 16)
    return n_rows if tr >= n_rows else tr


# ---------------------------------------------------------------------------
# Wrapper
# ---------------------------------------------------------------------------
@functools.partial(jax.jit, static_argnames=("scale_factor",))
def upsample_nearest(x, scale_factor):
    """Nearest-neighbour upsample of NCHW `x` by an integer scale factor."""
    s = int(scale_factor)
    B, C, H, W = x.shape
    if s == 1:
        return x

    if x.dtype not in (jnp.float32, jnp.bfloat16):
        # TODO(synk): non-f32/bf16 dtypes use a pure-JAX gather fallback.
        hi = jnp.arange(H * s) // s
        wi = jnp.arange(W * s) // s
        return x[:, :, hi, :][:, :, :, wi]

    is_f32 = x.dtype == jnp.float32
    itemsize = x.dtype.itemsize
    n_rows = B * C * H
    packed = W < _LANE

    if packed:
        # Pack r whole input rows per kernel row: K ~ 128, lane-dense output.
        r = _largest_divisor_leq(n_rows, max(1, -(-_LANE // W)))
        win, wout = r * W, r * s * s * W
        nrk = n_rows // r
        wb, nc = win, 1
        j = jnp.arange(wout)
        src = (j // (s * s * W)) * W + (j % (s * W)) // s
        mat = (src[None, :] == jnp.arange(win)[:, None]).astype(jnp.bfloat16)
        macs_per_row = win * wout
    else:
        # Width-only, block-diagonal replication; s height stores per chunk.
        win, wout = W, s * s * W
        nrk = n_rows
        wb = _pick_width_chunk(W)
        nc = W // wb
        j = jnp.arange(s * wb)
        mat = ((j // s)[None, :] == jnp.arange(wb)[:, None]).astype(jnp.bfloat16)
        macs_per_row = W * s * wb          # nc * wb * (s*wb)

    vmem_limit = _vmem_limit_bytes()
    mat_bytes = mat.shape[0] * mat.shape[1] * 2
    budget = max(1 << 20, int(0.7 * vmem_limit) - 2 * mat_bytes)
    tr = _pick_row_tile(nrk, win, wout, itemsize, budget, is_f32)
    grid = (pl.cdiv(nrk, tr),)

    kernel = _make_kernel(s=s, W=W, wb=wb, nc=nc, packed=packed, is_f32=is_f32)
    chunks = 3 if is_f32 else 1

    out_rows = pl.pallas_call(
        kernel,
        out_shape=jax.ShapeDtypeStruct((nrk, wout), x.dtype),
        grid=grid,
        in_specs=[
            pl.BlockSpec((tr, win), lambda t: (t, 0)),          # row tile
            pl.BlockSpec(mat.shape, lambda t: (0, 0)),          # resident 0/1 matrix
        ],
        out_specs=pl.BlockSpec((tr, wout), lambda t: (t, 0)),
        compiler_params=pltpu.CompilerParams(
            dimension_semantics=("parallel",),
            vmem_limit_bytes=vmem_limit,
        ),
        cost_estimate=pl.CostEstimate(
            flops=2 * chunks * nrk * macs_per_row,
            transcendentals=0,
            bytes_accessed=(n_rows * W + n_rows * s * s * W) * itemsize + mat_bytes,
        ),
    )(x.reshape(nrk, win), mat)

    # [nrk, wout] is exactly the contiguous NCHW output: free reshape back.
    return out_rows.reshape(B, C, H * s, W * s)


class upsample:
    """Minimal JAX/Pallas mirror of the PyTorch `upsample` module."""

    def __init__(self, size=None, scale_factor=None, mode="nearest", align_corners=None):
        self.name = type(self).__name__
        self.size = size
        self.scale_factor = scale_factor
        self.mode = mode
        self.align_corners = align_corners

    def __call__(self, x):
        if self.mode != "nearest" or self.size is not None:
            # TODO(synk): non-nearest modes / explicit size targets not implemented.
            raise NotImplementedError("only mode='nearest' with integer scale_factor")
        sf = self.scale_factor
        if isinstance(sf, (tuple, list)):
            if len(set(sf)) != 1:
                raise NotImplementedError("per-axis scale factors not implemented")
            sf = sf[0]
        if int(sf) != sf:
            raise NotImplementedError("non-integer scale_factor not implemented")
        return upsample_nearest(x, int(sf))


def reference_upsample(x, s):
    """Pure-JAX gather reference (matches PyTorch nearest for integer scale)."""
    hi = jnp.arange(x.shape[2] * s) // s
    wi = jnp.arange(x.shape[3] * s) // s
    return x[:, :, hi, :][:, :, :, wi]


if __name__ == "__main__":
    B, C, H, W, S = 2, 4, 16, 16, 2

    x = jax.random.normal(jax.random.PRNGKey(0), (B, C, H, W), jnp.float32)

    mod = upsample(scale_factor=S, mode="nearest")
    out = jax.block_until_ready(mod(x))

    ref = reference_upsample(x, S)
    assert out.shape == (B, C, H * S, W * S), out.shape
    assert jnp.allclose(out, ref, atol=1e-6, rtol=1e-6), \
        float(jnp.max(jnp.abs(out - ref)))

    print("KERNEL_OK")
</pallas_src>

<mosaic_0001>
module attributes {stable_mosaic.version = 11 : i64} {
  func.func @kernel(%arg0: i32, %arg1: memref<16x128xf32, #tpu.memory_space<vmem>>, %arg2: memref<128x512xbf16, #tpu.memory_space<vmem>>, %arg3: memref<16x512xf32, #tpu.memory_space<vmem>>) attributes {dimension_semantics = [#tpu.dimension_semantics<parallel>], iteration_bounds = array<i64: 1>, scalar_prefetch = 0 : i64, scratch_operands = 0 : i64, tpu.core_type = #tpu.core_type<tc>, window_params = [{transform_indices = @transform_0, window_bounds = array<i64: 16, 128>}, {pipeline_mode = #tpu.pipeline_mode<synchronous>, transform_indices = @transform_1, window_bounds = array<i64: 128, 512>}, {transform_indices = @transform_2, window_bounds = array<i64: 16, 512>}]} {
    %c0 = arith.constant 0 : index
    %c0_0 = arith.constant 0 : index
    %0 = vector.load %arg2[%c0, %c0_0] : memref<128x512xbf16, #tpu.memory_space<vmem>>, vector<128x512xbf16>
    %c0_1 = arith.constant 0 : index
    %c0_2 = arith.constant 0 : index
    %1 = vector.load %arg1[%c0_1, %c0_2] : memref<16x128xf32, #tpu.memory_space<vmem>>, vector<16x128xf32>
    %2 = math.absf %1 : vector<16x128xf32>
    %cst = arith.constant 0x7F800000 : f32
    %3 = vector.broadcast %cst : f32 to vector<16x128xf32>
    %4 = arith.cmpf olt, %2, %3 : vector<16x128xf32>
    %5 = tpu.bitcast %1 : vector<16x128xf32> -> vector<16x128xi32>
    %c-65536_i32 = arith.constant -65536 : i32
    %6 = vector.broadcast %c-65536_i32 : i32 to vector<16x128xi32>
    %7 = arith.andi %5, %6 : vector<16x128xi32>
    %8 = tpu.bitcast %7 : vector<16x128xi32> -> vector<16x128xf32>
    %9 = arith.select %4, %8, %1 : vector<16x128xi1>, vector<16x128xf32>
    %10 = arith.truncf %9 : vector<16x128xf32> to vector<16x128xbf16>
    %11 = arith.subf %1, %9 : vector<16x128xf32>
    %cst_3 = arith.constant 0.000000e+00 : f32
    %12 = vector.broadcast %cst_3 : f32 to vector<16x128xf32>
    %13 = arith.select %4, %11, %12 : vector<16x128xi1>, vector<16x128xf32>
    %14 = tpu.bitcast %13 : vector<16x128xf32> -> vector<16x128xi32>
    %c-65536_i32_4 = arith.constant -65536 : i32
    %15 = vector.broadcast %c-65536_i32_4 : i32 to vector<16x128xi32>
    %16 = arith.andi %14, %15 : vector<16x128xi32>
    %17 = tpu.bitcast %16 : vector<16x128xi32> -> vector<16x128xf32>
    %18 = arith.truncf %17 : vector<16x128xf32> to vector<16x128xbf16>
    %19 = arith.subf %13, %17 : vector<16x128xf32>
    %20 = arith.truncf %19 : vector<16x128xf32> to vector<16x128xbf16>
    %cst_5 = arith.constant dense<0.000000e+00> : vector<16x512xf32>
    %21 = tpu.matmul %10, %0, %cst_5 {dimension_numbers = #tpu.dot_dimension_numbers<[1], [0], [0], [1], [0, 0, 1, 1], [], []>} : vector<16x128xbf16>, vector<128x512xbf16>, vector<16x512xf32> -> vector<16x512xf32>
    %c0_6 = arith.constant 0 : index
    %c0_7 = arith.constant 0 : index
    %22 = vector.load %arg3[%c0_6, %c0_7] : memref<16x512xf32, #tpu.memory_space<vmem>>, vector<16x512xf32>
    tpu.vector_store %arg3[%c0_6, %c0_7], %21 {strides = array<i32>} : memref<16x512xf32, #tpu.memory_space<vmem>>, vector<16x512xf32>,
    %c0_8 = arith.constant 0 : index
    %c0_9 = arith.constant 0 : index
    %23 = vector.load %arg3[%c0_8, %c0_9] : memref<16x512xf32, #tpu.memory_space<vmem>>, vector<16x512xf32>
    %cst_10 = arith.constant dense<0.000000e+00> : vector<16x512xf32>
    %24 = tpu.matmul %18, %0, %cst_10 {dimension_numbers = #tpu.dot_dimension_numbers<[1], [0], [0], [1], [0, 0, 1, 1], [], []>} : vector<16x128xbf16>, vector<128x512xbf16>, vector<16x512xf32> -> vector<16x512xf32>
    %25 = arith.addf %23, %24 : vector<16x512xf32>
    %c0_11 = arith.constant 0 : index
    %c0_12 = arith.constant 0 : index
    %26 = vector.load %arg3[%c0_11, %c0_12] : memref<16x512xf32, #tpu.memory_space<vmem>>, vector<16x512xf32>
    tpu.vector_store %arg3[%c0_11, %c0_12], %25 {strides = array<i32>} : memref<16x512xf32, #tpu.memory_space<vmem>>, vector<16x512xf32>,
    %c0_13 = arith.constant 0 : index
    %c0_14 = arith.constant 0 : index
    %27 = vector.load %arg3[%c0_13, %c0_14] : memref<16x512xf32, #tpu.memory_space<vmem>>, vector<16x512xf32>
    %cst_15 = arith.constant dense<0.000000e+00> : vector<16x512xf32>
    %28 = tpu.matmul %20, %0, %cst_15 {dimension_numbers = #tpu.dot_dimension_numbers<[1], [0], [0], [1], [0, 0, 1, 1], [], []>} : vector<16x128xbf16>, vector<128x512xbf16>, vector<16x512xf32> -> vector<16x512xf32>
    %29 = arith.addf %27, %28 : vector<16x512xf32>
    %c0_16 = arith.constant 0 : index
    %c0_17 = arith.constant 0 : index
    %30 = vector.load %arg3[%c0_16, %c0_17] : memref<16x512xf32, #tpu.memory_space<vmem>>, vector<16x512xf32>
    tpu.vector_store %arg3[%c0_16, %c0_17], %29 {strides = array<i32>} : memref<16x512xf32, #tpu.memory_space<vmem>>, vector<16x512xf32>,
    return
  }
  func.func @transform_0(%arg0: i32) -> (i32, i32) {
    %c0_i32 = arith.constant 0 : i32
    %c0_i32_0 = arith.constant 0 : i32
    return %arg0, %c0_i32 : i32, i32
  }
  func.func @transform_1(%arg0: i32) -> (i32, i32) {
    %c0_i32 = arith.constant 0 : i32
    %c0_i32_0 = arith.constant 0 : i32
    %c0_i32_1 = arith.constant 0 : i32
    return %c0_i32, %c0_i32_0 : i32, i32
  }
  func.func @transform_2(%arg0: i32) -> (i32, i32) {
    %c0_i32 = arith.constant 0 : i32
    %c0_i32_0 = arith.constant 0 : i32
    return %arg0, %c0_i32 : i32, i32
  }
}

</mosaic_0001>

<llo_original>
// kernel: upsample_nearest.1
$region0: #{upsample_nearest.1}
  #allocation0 [shape = 'u32[]', space=smem, size = 0x4, offset = 0x4, fixed_abs, tag = 'smem constant byte address 0x4 - core index']
  #allocation1 [shape = 'u32[144,128]{1,0:T(1,128)}', space=vmem, size = 0x12000, scoped, tag = 'internal scratch']
  %s0 = inlined_call_operand.vmem [shape: f32[16,128], index: 0, kind: input, shape index: {}]
  %s1 = inlined_call_operand.vmem [shape: bf16[128,512], index: 1, kind: input, shape index: {}]
  %s2 = inlined_call_operand.vmem [shape: f32[16,512], index: 2, kind: output, shape index: {}]
  %s3 = sld [smem:[#allocation0]]
  $region18: #{upsample_nearest.1} parent=0
    _
  %s5 = ssub.s32 1, %s3
  %s6 = scalar_select 0, %s5, %s3
  // Predicated region
  $region2: #{upsample_nearest.1} parent=0 // pred_check
    _
  $region3: #{upsample_nearest.1} parent=0 // pred_check_branch
    %8 = sbr.rel (0) target = $region5
  $region4: #{upsample_nearest.1} parent=0 // pred_region
    _
  $region5: #{upsample_nearest.1} parent=0 // pred_fallthru
    _
  // Predicated region
  $region6: #{upsample_nearest.1} parent=0 // pred_check
    _
  $region7: #{upsample_nearest.1} parent=0 // pred_check_branch
    %10 = sbr.rel (0) target = $region9
  $region8: #{upsample_nearest.1} parent=0 // pred_region
    _
  $region9: #{upsample_nearest.1} parent=0 // pred_fallthru
    _
  %v12 = vld [vmem:[%s1] sm:$0xff]
  %v13 = vld [vmem:[%s1 + $0x8] sm:$0xff]
  %v14 = vld [vmem:[%s1 + $0x10] sm:$0xff]
  %v15 = vld [vmem:[%s1 + $0x18] sm:$0xff]
  %v16 = vld [vmem:[%s1 + $0x20] sm:$0xff]
  %v17 = vld [vmem:[%s1 + $0x28] sm:$0xff]
  %v18 = vld [vmem:[%s1 + $0x30] sm:$0xff]
  %v19 = vld [vmem:[%s1 + $0x38] sm:$0xff]
  %v20 = vld [vmem:[%s1 + $0x40] sm:$0xff]
  %v21 = vld [vmem:[%s1 + $0x48] sm:$0xff]
  %v22 = vld [vmem:[%s1 + $0x50] sm:$0xff]
  %v23 = vld [vmem:[%s1 + $0x58] sm:$0xff]
  %v24 = vld [vmem:[%s1 + $0x60] sm:$0xff]
  %v25 = vld [vmem:[%s1 + $0x68] sm:$0xff]
  %v26 = vld [vmem:[%s1 + $0x70] sm:$0xff]
  %v27 = vld [vmem:[%s1 + $0x78] sm:$0xff]
  %v28 = vld [vmem:[%s1 + $0x80] sm:$0xff]
  %v29 = vld [vmem:[%s1 + $0x88] sm:$0xff]
  %v30 = vld [vmem:[%s1 + $0x90] sm:$0xff]
  %v31 = vld [vmem:[%s1 + $0x98] sm:$0xff]
  %v32 = vld [vmem:[%s1 + $0xa0] sm:$0xff]
  %v33 = vld [vmem:[%s1 + $0xa8] sm:$0xff]
  %v34 = vld [vmem:[%s1 + $0xb0] sm:$0xff]
  %v35 = vld [vmem:[%s1 + $0xb8] sm:$0xff]
  %v36 = vld [vmem:[%s1 + $0xc0] sm:$0xff]
  %v37 = vld [vmem:[%s1 + $0xc8] sm:$0xff]
  %v38 = vld [vmem:[%s1 + $0xd0] sm:$0xff]
  %v39 = vld [vmem:[%s1 + $0xd8] sm:$0xff]
  %v40 = vld [vmem:[%s1 + $0xe0] sm:$0xff]
  %v41 = vld [vmem:[%s1 + $0xe8] sm:$0xff]
  %v42 = vld [vmem:[%s1 + $0xf0] sm:$0xff]
  %v43 = vld [vmem:[%s1 + $0xf8] sm:$0xff]
  %v44 = vld [vmem:[%s0] sm:$0xff]
  %v45 = vld [vmem:[%s0 + $0x8] sm:$0xff]
  %v46 = vand.u32 2147483647, %v44
  %v47 = vand.u32 2147483647, %v45
  %vm48 = vcmp.lt.f32.partialorder %v46, inf
  %vm49 = vcmp.lt.f32.partialorder %v47, inf
  %v52 = vand.u32 %v44, 4294901760
  %v53 = vand.u32 %v45, 4294901760
  %v56 = vsel %vm48, %v52, %v44
  %v57 = vsel %vm49, %v53, %v45
  %v58 = vpack.c.bf16 %v57, %v56
  %v59 = vsub.f32 %v44, %v56
  %v60 = vsub.f32 %v45, %v57
  %v61 = vsel %vm48, %v59, 0.0
  %v62 = vsel %vm49, %v60, 0.0
  %v65 = vand.u32 %v61, 4294901760
  %v66 = vand.u32 %v62, 4294901760
  %v69 = vpack.c.bf16 %v66, %v65
  %v70 = vsub.f32 %v61, %v65
  %v71 = vsub.f32 %v62, %v66
  %v72 = vpack.c.bf16 %v71, %v70
  %v105 = vunpack.c.l.b16 %v12
  %v106 = vunpack.c.h.b16 %v12
  %v107 = vunpack.c.l.b16 %v13
  %v108 = vunpack.c.h.b16 %v13
  %v109 = vunpack.c.l.b16 %v14
  %v110 = vunpack.c.h.b16 %v14
  %v111 = vunpack.c.l.b16 %v15
  %v112 = vunpack.c.h.b16 %v15
  %v113 = vunpack.c.l.b16 %v16
  %v114 = vunpack.c.h.b16 %v16
  %v115 = vunpack.c.l.b16 %v17
  %v116 = vunpack.c.h.b16 %v17
  %v117 = vunpack.c.l.b16 %v18
  %v118 = vunpack.c.h.b16 %v18
  %v119 = vunpack.c.l.b16 %v19
  %v120 = vunpack.c.h.b16 %v19
  %v121 = vunpack.c.l.b16 %v20
  %v122 = vunpack.c.h.b16 %v20
  %v123 = vunpack.c.l.b16 %v21
  %v124 = vunpack.c.h.b16 %v21
  %v125 = vunpack.c.l.b16 %v22
  %v126 = vunpack.c.h.b16 %v22
  %v127 = vunpack.c.l.b16 %v23
  %v128 = vunpack.c.h.b16 %v23
  %v129 = vunpack.c.l.b16 %v24
  %v130 = vunpack.c.h.b16 %v24
  %v131 = vunpack.c.l.b16 %v25
  %v132 = vunpack.c.h.b16 %v25
  %v133 = vunpack.c.l.b16 %v26
  %v134 = vunpack.c.h.b16 %v26
  %v135 = vunpack.c.l.b16 %v27
  %v136 = vunpack.c.h.b16 %v27
  %v137 = vunpack.c.l.b16 %v28
  %v138 = vunpack.c.h.b16 %v28
  %v139 = vunpack.c.l.b16 %v29
  %v140 = vunpack.c.h.b16 %v29
  %v141 = vunpack.c.l.b16 %v30
  %v142 = vunpack.c.h.b16 %v30
  %v143 = vunpack.c.l.b16 %v31
  %v144 = vunpack.c.h.b16 %v31
  %v145 = vunpack.c.l.b16 %v32
  %v146 = vunpack.c.h.b16 %v32
  %v147 = vunpack.c.l.b16 %v33
  %v148 = vunpack.c.h.b16 %v33
  %v149 = vunpack.c.l.b16 %v34
  %v150 = vunpack.c.h.b16 %v34
  %v151 = vunpack.c.l.b16 %v35
  %v152 = vunpack.c.h.b16 %v35
  %v153 = vunpack.c.l.b16 %v36
  %v154 = vunpack.c.h.b16 %v36
  %v155 = vunpack.c.l.b16 %v37
  %v156 = vunpack.c.h.b16 %v37
  %v157 = vunpack.c.l.b16 %v38
  %v158 = vunpack.c.h.b16 %v38
  %v159 = vunpack.c.l.b16 %v39
  %v160 = vunpack.c.h.b16 %v39
  %v161 = vunpack.c.l.b16 %v40
  %v162 = vunpack.c.h.b16 %v40
  %v163 = vunpack.c.l.b16 %v41
  %v164 = vunpack.c.h.b16 %v41
  %v165 = vunpack.c.l.b16 %v42
  %v166 = vunpack.c.h.b16 %v42
  %v167 = vunpack.c.l.b16 %v43
  %v168 = vunpack.c.h.b16 %v43
  %v169 = vpack.c.b16 %v109, %v105
  %v170 = vpack.c.b16 %v110, %v106
  %v171 = vpack.c.b16 %v111, %v107
  %v172 = vpack.c.b16 %v112, %v108
  %v173 = vpack.c.b16 %v117, %v113
  %v174 = vpack.c.b16 %v118, %v114
  %v175 = vpack.c.b16 %v119, %v115
  %v176 = vpack.c.b16 %v120, %v116
  %v177 = vpack.c.b16 %v125, %v121
  %v178 = vpack.c.b16 %v126, %v122
  %v179 = vpack.c.b16 %v127, %v123
  %v180 = vpack.c.b16 %v128, %v124
  %v181 = vpack.c.b16 %v133, %v129
  %v182 = vpack.c.b16 %v134, %v130
  %v183 = vpack.c.b16 %v135, %v131
  %v184 = vpack.c.b16 %v136, %v132
  %v185 = vpack.c.b16 %v141, %v137
  %v186 = vpack.c.b16 %v142, %v138
  %v187 = vpack.c.b16 %v143, %v139
  %v188 = vpack.c.b16 %v144, %v140
  %v189 = vpack.c.b16 %v149, %v145
  %v190 = vpack.c.b16 %v150, %v146
  %v191 = vpack.c.b16 %v151, %v147
  %v192 = vpack.c.b16 %v152, %v148
  %v193 = vpack.c.b16 %v157, %v153
  %v194 = vpack.c.b16 %v158, %v154
  %v195 = vpack.c.b16 %v159, %v155
  %v196 = vpack.c.b16 %v160, %v156
  %v197 = vpack.c.b16 %v165, %v161
  %v198 = vpack.c.b16 %v166, %v162
  %v199 = vpack.c.b16 %v167, %v163
  %v200 = vpack.c.b16 %v168, %v164
  %233 = vmatprep.subr.bf16.mxu0 %v170
  %234 = vmatpush1.bf16.msra.mxu0 %v169
  %235 = vmatprep.subr.bf16.mxu0 %v174
  %236 = vmatpush1.bf16.msra.mxu0 %v173
  %237 = vmatprep.subr.bf16.mxu0 %v178
  %238 = vmatpush1.bf16.msra.mxu0 %v177
  %239 = vmatprep.subr.bf16.mxu0 %v182
  %240 = vmatpush1.bf16.msra.mxu0 %v181
  %241 = vmatprep.subr.bf16.mxu0 %v186
  %242 = vmatpush1.bf16.msra.mxu0 %v185
  %243 = vmatprep.subr.bf16.mxu0 %v190
  %244 = vmatpush1.bf16.msra.mxu0 %v189
  %245 = vmatprep.subr.bf16.mxu0 %v194
  %246 = vmatpush1.bf16.msra.mxu0 %v193
  %247 = vmatprep.subr.bf16.mxu0 %v198
  %248 = vmatpush1.bf16.msra.mxu0 %v197
  %249 = vmatprep.subr.bf16.mxu0 0
  %250 = vmatpush1.bf16.msra.mxu0 0
  %251 = vmatprep.subr.bf16.mxu0 0
  %252 = vmatpush1.bf16.msra.mxu0 0
  %253 = vmatprep.subr.bf16.mxu0 0
  %254 = vmatpush1.bf16.msra.mxu0 0
  %255 = vmatprep.subr.bf16.mxu0 0
  %256 = vmatpush1.bf16.msra.mxu0 0
  %257 = vmatprep.subr.bf16.mxu0 0
  %258 = vmatpush1.bf16.msra.mxu0 0
  %259 = vmatprep.subr.bf16.mxu0 0
  %260 = vmatpush1.bf16.msra.mxu0 0
  %261 = vmatprep.subr.bf16.mxu0 0
  %262 = vmatpush1.bf16.msra.mxu0 0
  %263 = vmatprep.subr.bf16.mxu0 0
  %264 = vmatpush1.bf16.msra.mxu0 0
  %265 = vmatprep.mubr.bf16.mxu0 0
  %266 = vmatmul.mubr.bf16.gmra.mrb[0].mxu0 %v58
  %v267 = vpop.f32.mrb[0].mxu0
  %v268 = vadd.f32 0.0, %v267
  %v269 = vpop.f32.mrb[0].mxu0
  %v270 = vadd.f32 0.0, %v269
  %v271 = vpop.f32.mrb[0].mxu0
  %v272 = vadd.f32 0.0, %v271
  %v273 = vpop.f32.mrb[0].mxu0
  %v274 = vadd.f32 0.0, %v273
  %275 = vdwg.mxu0
  %276 = vmatprep.subr.bf16.mxu0 %v172
  %277 = vmatpush1.bf16.msra.mxu0 %v171
  %278 = vmatprep.subr.bf16.mxu0 %v176
  %279 = vmatpush1.bf16.msra.mxu0 %v175
  %280 = vmatprep.subr.bf16.mxu0 %v180
  %281 = vmatpush1.bf16.msra.mxu0 %v179
  %282 = vmatprep.subr.bf16.mxu0 %v184
  %283 = vmatpush1.bf16.msra.mxu0 %v183
  %284 = vmatprep.subr.bf16.mxu0 %v188
  %285 = vmatpush1.bf16.msra.mxu0 %v187
  %286 = vmatprep.subr.bf16.mxu0 %v192
  %287 = vmatpush1.bf16.msra.mxu0 %v191
  %288 = vmatprep.subr.bf16.mxu0 %v196
  %289 = vmatpush1.bf16.msra.mxu0 %v195
  %290 = vmatprep.subr.bf16.mxu0 %v200
  %291 = vmatpush1.bf16.msra.mxu0 %v199
  %292 = vmatprep.subr.bf16.mxu0 0
  %293 = vmatpush1.bf16.msra.mxu0 0
  %294 = vmatprep.subr.bf16.mxu0 0
  %295 = vmatpush1.bf16.msra.mxu0 0
  %296 = vmatprep.subr.bf16.mxu0 0
  %297 = vmatpush1.bf16.msra.mxu0 0
  %298 = vmatprep.subr.bf16.mxu0 0
  %299 = vmatpush1.bf16.msra.mxu0 0
  %300 = vmatprep.subr.bf16.mxu0 0
  %301 = vmatpush1.bf16.msra.mxu0 0
  %302 = vmatprep.subr.bf16.mxu0 0
  %303 = vmatpush1.bf16.msra.mxu0 0
  %304 = vmatprep.subr.bf16.mxu0 0
  %305 = vmatpush1.bf16.msra.mxu0 0
  %306 = vmatprep.subr.bf16.mxu0 0
  %307 = vmatpush1.bf16.msra.mxu0 0
  %308 = vmatprep.mubr.bf16.mxu0 0
  %309 = vmatmul.mubr.bf16.gmra.mrb[0].mxu0 %v58
  %v310 = vpop.f32.mrb[0].mxu0
  %v311 = vadd.f32 0.0, %v310
  %v312 = vpop.f32.mrb[0].mxu0
  %v313 = vadd.f32 0.0, %v312
  %v314 = vpop.f32.mrb[0].mxu0
  %v315 = vadd.f32 0.0, %v314
  %v316 = vpop.f32.mrb[0].mxu0
  %v317 = vadd.f32 0.0, %v316
  %318 = vdwg.mxu0
  %319 = vst [vmem:[%s2] sm:$0xff] %v268
  %320 = vst [vmem:[%s2 + $0x8] sm:$0xff] %v270
  %321 = vst [vmem:[%s2 + $0x10] sm:$0xff] %v311
  %322 = vst [vmem:[%s2 + $0x18] sm:$0xff] %v313
  %323 = vst [vmem:[%s2 + $0x20] sm:$0xff] %v272
  %324 = vst [vmem:[%s2 + $0x28] sm:$0xff] %v274
  %325 = vst [vmem:[%s2 + $0x30] sm:$0xff] %v315
  %326 = vst [vmem:[%s2 + $0x38] sm:$0xff] %v317
  %v327 = vld [vmem:[%s2] sm:$0xff]
  %v328 = vld [vmem:[%s2 + $0x8] sm:$0xff]
  %v329 = vld [vmem:[%s2 + $0x10] sm:$0xff]
  %v330 = vld [vmem:[%s2 + $0x18] sm:$0xff]
  %v331 = vld [vmem:[%s2 + $0x20] sm:$0xff]
  %v332 = vld [vmem:[%s2 + $0x28] sm:$0xff]
  %v333 = vld [vmem:[%s2 + $0x30] sm:$0xff]
  %v334 = vld [vmem:[%s2 + $0x38] sm:$0xff]
  %335 = vmatprep.subr.bf16.mxu0 %v170
  %336 = vmatpush1.bf16.msra.mxu0 %v169
  %337 = vmatprep.subr.bf16.mxu0 %v174
  %338 = vmatpush1.bf16.msra.mxu0 %v173
  %339 = vmatprep.subr.bf16.mxu0 %v178
  %340 = vmatpush1.bf16.msra.mxu0 %v177
  %341 = vmatprep.subr.bf16.mxu0 %v182
  %342 = vmatpush1.bf16.msra.mxu0 %v181
  %343 = vmatprep.subr.bf16.mxu0 %v186
  %344 = vmatpush1.bf16.msra.mxu0 %v185
  %345 = vmatprep.subr.bf16.mxu0 %v190
  %346 = vmatpush1.bf16.msra.mxu0 %v189
  %347 = vmatprep.subr.bf16.mxu0 %v194
  %348 = vmatpush1.bf16.msra.mxu0 %v193
  %349 = vmatprep.subr.bf16.mxu0 %v198
  %350 = vmatpush1.bf16.msra.mxu0 %v197
  %351 = vmatprep.subr.bf16.mxu0 0
  %352 = vmatpush1.bf16.msra.mxu0 0
  %353 = vmatprep.subr.bf16.mxu0 0
  %354 = vmatpush1.bf16.msra.mxu0 0
  %355 = vmatprep.subr.bf16.mxu0 0
  %356 = vmatpush1.bf16.msra.mxu0 0
  %357 = vmatprep.subr.bf16.mxu0 0
  %358 = vmatpush1.bf16.msra.mxu0 0
  %359 = vmatprep.subr.bf16.mxu0 0
  %360 = vmatpush1.bf16.msra.mxu0 0
  %361 = vmatprep.subr.bf16.mxu0 0
  %362 = vmatpush1.bf16.msra.mxu0 0
  %363 = vmatprep.subr.bf16.mxu0 0
  %364 = vmatpush1.bf16.msra.mxu0 0
  %365 = vmatprep.subr.bf16.mxu0 0
  %366 = vmatpush1.bf16.msra.mxu0 0
  %367 = vmatprep.mubr.bf16.mxu0 0
  %368 = vmatmul.mubr.bf16.gmra.mrb[0].mxu0 %v69
  %v369 = vpop.f32.mrb[0].mxu0
  %v370 = vadd.f32 0.0, %v369
  %v371 = vpop.f32.mrb[0].mxu0
  %v372 = vadd.f32 0.0, %v371
  %v373 = vpop.f32.mrb[0].mxu0
  %v374 = vadd.f32 0.0, %v373
  %v375 = vpop.f32.mrb[0].mxu0
  %v376 = vadd.f32 0.0, %v375
  %377 = vdwg.mxu0
  %378 = vmatprep.subr.bf16.mxu0 %v172
  %379 = vmatpush1.bf16.msra.mxu0 %v171
  %380 = vmatprep.subr.bf16.mxu0 %v176
  %381 = vmatpush1.bf16.msra.mxu0 %v175
  %382 = vmatprep.subr.bf16.mxu0 %v180
  %383 = vmatpush1.bf16.msra.mxu0 %v179
  %384 = vmatprep.subr.bf16.mxu0 %v184
  %385 = vmatpush1.bf16.msra.mxu0 %v183
  %386 = vmatprep.subr.bf16.mxu0 %v188
  %387 = vmatpush1.bf16.msra.mxu0 %v187
  %388 = vmatprep.subr.bf16.mxu0 %v192
  %389 = vmatpush1.bf16.msra.mxu0 %v191
  %390 = vmatprep.subr.bf16.mxu0 %v196
  %391 = vmatpush1.bf16.msra.mxu0 %v195
  %392 = vmatprep.subr.bf16.mxu0 %v200
  %393 = vmatpush1.bf16.msra.mxu0 %v199
  %394 = vmatprep.subr.bf16.mxu0 0
  %395 = vmatpush1.bf16.msra.mxu0 0
  %396 = vmatprep.subr.bf16.mxu0 0
  %397 = vmatpush1.bf16.msra.mxu0 0
  %398 = vmatprep.subr.bf16.mxu0 0
  %399 = vmatpush1.bf16.msra.mxu0 0
  %400 = vmatprep.subr.bf16.mxu0 0
  %401 = vmatpush1.bf16.msra.mxu0 0
  %402 = vmatprep.subr.bf16.mxu0 0
  %403 = vmatpush1.bf16.msra.mxu0 0
  %404 = vmatprep.subr.bf16.mxu0 0
  %405 = vmatpush1.bf16.msra.mxu0 0
  %406 = vmatprep.subr.bf16.mxu0 0
  %407 = vmatpush1.bf16.msra.mxu0 0
  %408 = vmatprep.subr.bf16.mxu0 0
  %409 = vmatpush1.bf16.msra.mxu0 0
  %410 = vmatprep.mubr.bf16.mxu0 0
  %411 = vmatmul.mubr.bf16.gmra.mrb[0].mxu0 %v69
  %v412 = vpop.f32.mrb[0].mxu0
  %v413 = vadd.f32 0.0, %v412
  %v414 = vpop.f32.mrb[0].mxu0
  %v415 = vadd.f32 0.0, %v414
  %v416 = vpop.f32.mrb[0].mxu0
  %v417 = vadd.f32 0.0, %v416
  %v418 = vpop.f32.mrb[0].mxu0
  %v419 = vadd.f32 0.0, %v418
  %420 = vdwg.mxu0
  %v421 = vadd.f32 %v327, %v370
  %v422 = vadd.f32 %v328, %v372
  %v423 = vadd.f32 %v329, %v413
  %v424 = vadd.f32 %v330, %v415
  %v425 = vadd.f32 %v331, %v374
  %v426 = vadd.f32 %v332, %v376
  %v427 = vadd.f32 %v333, %v417
  %v428 = vadd.f32 %v334, %v419
  %429 = vst [vmem:[%s2] sm:$0xff] %v421
  %430 = vst [vmem:[%s2 + $0x8] sm:$0xff] %v422
  %431 = vst [vmem:[%s2 + $0x10] sm:$0xff] %v423
  %432 = vst [vmem:[%s2 + $0x18] sm:$0xff] %v424
  %433 = vst [vmem:[%s2 + $0x20] sm:$0xff] %v425
  %434 = vst [vmem:[%s2 + $0x28] sm:$0xff] %v426
  %435 = vst [vmem:[%s2 + $0x30] sm:$0xff] %v427
  %436 = vst [vmem:[%s2 + $0x38] sm:$0xff] %v428
  %v437 = vld [vmem:[%s2] sm:$0xff]
  %v438 = vld [vmem:[%s2 + $0x8] sm:$0xff]
  %v439 = vld [vmem:[%s2 + $0x10] sm:$0xff]
  %v440 = vld [vmem:[%s2 + $0x18] sm:$0xff]
  %v441 = vld [vmem:[%s2 + $0x20] sm:$0xff]
  %v442 = vld [vmem:[%s2 + $0x28] sm:$0xff]
  %v443 = vld [vmem:[%s2 + $0x30] sm:$0xff]
  %v444 = vld [vmem:[%s2 + $0x38] sm:$0xff]
  %445 = vmatprep.subr.bf16.mxu0 %v170
  %446 = vmatpush1.bf16.msra.mxu0 %v169
  %447 = vmatprep.subr.bf16.mxu0 %v174
  %448 = vmatpush1.bf16.msra.mxu0 %v173
  %449 = vmatprep.subr.bf16.mxu0 %v178
  %450 = vmatpush1.bf16.msra.mxu0 %v177
  %451 = vmatprep.subr.bf16.mxu0 %v182
  %452 = vmatpush1.bf16.msra.mxu0 %v181
  %453 = vmatprep.subr.bf16.mxu0 %v186
  %454 = vmatpush1.bf16.msra.mxu0 %v185
  %455 = vmatprep.subr.bf16.mxu0 %v190
  %456 = vmatpush1.bf16.msra.mxu0 %v189
  %457 = vmatprep.subr.bf16.mxu0 %v194
  %458 = vmatpush1.bf16.msra.mxu0 %v193
  %459 = vmatprep.subr.bf16.mxu0 %v198
  %460 = vmatpush1.bf16.msra.mxu0 %v197
  %461 = vmatprep.subr.bf16.mxu0 0
  %462 = vmatpush1.bf16.msra.mxu0 0
  %463 = vmatprep.subr.bf16.mxu0 0
  %464 = vmatpush1.bf16.msra.mxu0 0
  %465 = vmatprep.subr.bf16.mxu0 0
  %466 = vmatpush1.bf16.msra.mxu0 0
  %467 = vmatprep.subr.bf16.mxu0 0
  %468 = vmatpush1.bf16.msra.mxu0 0
  %469 = vmatprep.subr.bf16.mxu0 0
  %470 = vmatpush1.bf16.msra.mxu0 0
  %471 = vmatprep.subr.bf16.mxu0 0
  %472 = vmatpush1.bf16.msra.mxu0 0
  %473 = vmatprep.subr.bf16.mxu0 0
  %474 = vmatpush1.bf16.msra.mxu0 0
  %475 = vmatprep.subr.bf16.mxu0 0
  %476 = vmatpush1.bf16.msra.mxu0 0
  %477 = vmatprep.mubr.bf16.mxu0 0
  %478 = vmatmul.mubr.bf16.gmra.mrb[0].mxu0 %v72
  %v479 = vpop.f32.mrb[0].mxu0
  %v480 = vadd.f32 0.0, %v479
  %v481 = vpop.f32.mrb[0].mxu0
  %v482 = vadd.f32 0.0, %v481
  %v483 = vpop.f32.mrb[0].mxu0
  %v484 = vadd.f32 0.0, %v483
  %v485 = vpop.f32.mrb[0].mxu0
  %v486 = vadd.f32 0.0, %v485
  %487 = vdwg.mxu0
  %488 = vmatprep.subr.bf16.mxu0 %v172
  %489 = vmatpush1.bf16.msra.mxu0 %v171
  %490 = vmatprep.subr.bf16.mxu0 %v176
  %491 = vmatpush1.bf16.msra.mxu0 %v175
  %492 = vmatprep.subr.bf16.mxu0 %v180
  %493 = vmatpush1.bf16.msra.mxu0 %v179
  %494 = vmatprep.subr.bf16.mxu0 %v184
  %495 = vmatpush1.bf16.msra.mxu0 %v183
  %496 = vmatprep.subr.bf16.mxu0 %v188
  %497 = vmatpush1.bf16.msra.mxu0 %v187
  %498 = vmatprep.subr.bf16.mxu0 %v192
  %499 = vmatpush1.bf16.msra.mxu0 %v191
  %500 = vmatprep.subr.bf16.mxu0 %v196
  %501 = vmatpush1.bf16.msra.mxu0 %v195
  %502 = vmatprep.subr.bf16.mxu0 %v200
  %503 = vmatpush1.bf16.msra.mxu0 %v199
  %504 = vmatprep.subr.bf16.mxu0 0
  %505 = vmatpush1.bf16.msra.mxu0 0
  %506 = vmatprep.subr.bf16.mxu0 0
  %507 = vmatpush1.bf16.msra.mxu0 0
  %508 = vmatprep.subr.bf16.mxu0 0
  %509 = vmatpush1.bf16.msra.mxu0 0
  %510 = vmatprep.subr.bf16.mxu0 0
  %511 = vmatpush1.bf16.msra.mxu0 0
  %512 = vmatprep.subr.bf16.mxu0 0
  %513 = vmatpush1.bf16.msra.mxu0 0
  %514 = vmatprep.subr.bf16.mxu0 0
  %515 = vmatpush1.bf16.msra.mxu0 0
  %516 = vmatprep.subr.bf16.mxu0 0
  %517 = vmatpush1.bf16.msra.mxu0 0
  %518 = vmatprep.subr.bf16.mxu0 0
  %519 = vmatpush1.bf16.msra.mxu0 0
  %520 = vmatprep.mubr.bf16.mxu0 0
  %521 = vmatmul.mubr.bf16.gmra.mrb[0].mxu0 %v72
  %v522 = vpop.f32.mrb[0].mxu0
  %v523 = vadd.f32 0.0, %v522
  %v524 = vpop.f32.mrb[0].mxu0
  %v525 = vadd.f32 0.0, %v524
  %v526 = vpop.f32.mrb[0].mxu0
  %v527 = vadd.f32 0.0, %v526
  %v528 = vpop.f32.mrb[0].mxu0
  %v529 = vadd.f32 0.0, %v528
  %530 = vdwg.mxu0
  %v531 = vadd.f32 %v437, %v480
  %v532 = vadd.f32 %v438, %v482
  %v533 = vadd.f32 %v439, %v523
  %v534 = vadd.f32 %v440, %v525
  %v535 = vadd.f32 %v441, %v484
  %v536 = vadd.f32 %v442, %v486
  %v537 = vadd.f32 %v443, %v527
  %v538 = vadd.f32 %v444, %v529
  %539 = vst [vmem:[%s2] sm:$0xff] %v531
  %540 = vst [vmem:[%s2 + $0x8] sm:$0xff] %v532
  %541 = vst [vmem:[%s2 + $0x10] sm:$0xff] %v533
  %542 = vst [vmem:[%s2 + $0x18] sm:$0xff] %v534
  %543 = vst [vmem:[%s2 + $0x20] sm:$0xff] %v535
  %544 = vst [vmem:[%s2 + $0x28] sm:$0xff] %v536
  %545 = vst [vmem:[%s2 + $0x30] sm:$0xff] %v537
  %546 = vst [vmem:[%s2 + $0x38] sm:$0xff] %v538
  // Predicated region
  $region10: #{upsample_nearest.1} parent=0 // pred_check
    _
  $region11: #{upsample_nearest.1} parent=0 // pred_check_branch
    %548 = sbr.rel (0) target = $region13
  $region12: #{upsample_nearest.1} parent=0 // pred_region
    _
  $region13: #{upsample_nearest.1} parent=0 // pred_fallthru
    _
  // Predicated region
  $region14: #{upsample_nearest.1} parent=0 // pred_check
    _
  $region15: #{upsample_nearest.1} parent=0 // pred_check_branch
    %550 = sbr.rel (0) target = $region17
  $region16: #{upsample_nearest.1} parent=0 // pred_region
    _
  $region17: #{upsample_nearest.1} parent=0 // pred_fallthru
    _

</llo_original>
